<compile_context>
chip_gen: v5e
topology: v5e:2x2
jax: 0.10.0
libtpu: 0.0.40
codegen_flags: <defaults>
</compile_context>

<pallas_src>
import functools

import jax
import jax.numpy as jnp
from jax.experimental import pallas as pl
from jax.experimental.pallas import tpu as pltpu


def _round_up(v, m):
    return (v + m - 1) // m * m


# ----------------------------------------------------------------------------
# Small-graph fast path: everything resident in VMEM, single launch.
# ----------------------------------------------------------------------------
def _netreg_small_kernel(adj_ref, x_ref, w1_ref, w2_ref, b2_ref, o_ref):
    a = adj_ref[...]                                           # [Np, Np] bf16
    # Layer 1 reordered: A @ (X_aug W1_aug)  ==  (A @ X_aug) @ W1_aug
    # (b1 is row F of W1_aug, paired with the ones column of X_aug -> exact).
    ax = jnp.dot(a, x_ref[...], preferred_element_type=jnp.float32)
    h = jnp.dot(ax.astype(jnp.bfloat16), w1_ref[...],
                preferred_element_type=jnp.float32)
    h = jnp.maximum(h, 0.0)                                    # ReLU
    # TODO(synk): F.dropout(training=True) is stochastic; eval-mode identity here.
    z = jnp.dot(h.astype(jnp.bfloat16), w2_ref[...],
                preferred_element_type=jnp.float32) + b2_ref[...]
    o_ref[...] = jnp.dot(a, z.astype(jnp.bfloat16),
                         preferred_element_type=jnp.float32).astype(o_ref.dtype)


# ----------------------------------------------------------------------------
# General tiled path: two-phase grid (phase, node row tile), z in VMEM scratch.
# ----------------------------------------------------------------------------
def _netreg_tiled_kernel(adj_ref, x_ref, w1_ref, w2_ref, b2_ref,
                         o_ref, z_ref, *, tm):
    phase = pl.program_id(0)
    t = pl.program_id(1)

    @pl.when(phase == 0)
    def _layer1():
        a = adj_ref[...]                                       # [tm, Np] bf16
        ax = jnp.dot(a, x_ref[...], preferred_element_type=jnp.float32)
        h = jnp.dot(ax.astype(jnp.bfloat16), w1_ref[...],
                    preferred_element_type=jnp.float32)
        h = jnp.maximum(h, 0.0)
        # TODO(synk): dropout implemented as eval-mode identity.
        z = jnp.dot(h.astype(jnp.bfloat16), w2_ref[...],
                    preferred_element_type=jnp.float32) + b2_ref[...]
        start = pl.multiple_of(t * tm, tm)
        z_ref[pl.ds(start, tm), :] = z.astype(z_ref.dtype)
        # No o_ref write in phase 0: the output index_map pins phase 0 to block 0,
        # which is revisited (and fully written) by phase 1 / tile 0 before flush.

    @pl.when(phase == 1)
    def _layer2():
        out = jnp.dot(adj_ref[...], z_ref[...],
                      preferred_element_type=jnp.float32)
        o_ref[...] = out.astype(o_ref.dtype)


def net_reg_forward(x, adj_bf16, pparams, *, tm=256, small_graph_max=1024,
                    force_general=False):
    """Fused NetReg forward. `adj_bf16` is the precomputed normalized adjacency."""
    n, f = x.shape
    f_pad, h_pad = pparams["w1"].shape
    out_pad = pparams["w2"].shape[1]
    out_dim = pparams["out_dim"]
    ones_col = pparams["ones_col"]

    use_fast = (not force_general) and (_round_up(n, 128) <= small_graph_max)
    n_pad = _round_up(n, 128) if use_fast else _round_up(n, tm)

    # Zero-pad node / feature axes (exact: padded rows & cols contribute 0), and
    # set the ones column that carries b1 through the MXU.
    x_p = jnp.zeros((n_pad, f_pad), jnp.bfloat16)
    x_p = x_p.at[:n, :f].set(x.astype(jnp.bfloat16))
    x_p = x_p.at[:n, ones_col].set(jnp.bfloat16(1.0))
    adj_p = jnp.zeros((n_pad, n_pad), jnp.bfloat16).at[:n, :n].set(adj_bf16)

    if use_fast:
        out_p = pl.pallas_call(
            _netreg_small_kernel,
            out_shape=jax.ShapeDtypeStruct((n_pad, out_pad), jnp.float32),
        )(adj_p, x_p, pparams["w1"], pparams["w2"], pparams["b2"])
        return out_p[:n, :out_dim]

    num_tiles = n_pad // tm
    kernel = functools.partial(_netreg_tiled_kernel, tm=tm)

    # Explicit VMEM budget: A double-buffer + (constant-index) X/W blocks + out
    # double-buffer + z scratch, plus headroom for in-kernel intermediates.
    # Capped at 48 MiB (leave room on v7x's 64 MiB physical VMEM).
    footprint = (2 * tm * n_pad * 2            # A blocks (bf16, double buffered)
                 + 2 * n_pad * f_pad * 2       # X
                 + 2 * f_pad * h_pad * 2       # W1
                 + 2 * h_pad * out_pad * 2     # W2
                 + 2 * 8 * out_pad * 4         # b2 (sublane padded)
                 + 2 * tm * out_pad * 4        # out blocks (f32)
                 + n_pad * out_pad * 2)        # z scratch (bf16)
    vmem_limit = int(min(max(footprint * 3 // 2, 16 << 20), 48 << 20))

    out_p = pl.pallas_call(
        kernel,
        out_shape=jax.ShapeDtypeStruct((n_pad, out_pad), jnp.float32),
        grid_spec=pltpu.PrefetchScalarGridSpec(
            num_scalar_prefetch=0,
            grid=(2, num_tiles),                       # (phase, node row tile)
            in_specs=[
                pl.BlockSpec((tm, n_pad), lambda p, t: (t, 0)),       # A row block
                pl.BlockSpec((n_pad, f_pad), lambda p, t: (0, 0)),    # X (ones col)
                pl.BlockSpec((f_pad, h_pad), lambda p, t: (0, 0)),    # W1 (b1 row)
                pl.BlockSpec((h_pad, out_pad), lambda p, t: (0, 0)),  # W2
                pl.BlockSpec((1, out_pad), lambda p, t: (0, 0)),      # b2
            ],
            # Phase 0 revisits output block 0 (never flushed until phase 1 / tile 0
            # rewrites it); phase 1 maps tile t -> block t.
            out_specs=pl.BlockSpec((tm, out_pad), lambda p, t: (p * t, 0)),
            scratch_shapes=[pltpu.VMEM((n_pad, out_pad), jnp.bfloat16)],  # z
        ),
        # Both axes sequential: the z scratch carries data across tiles/phases.
        compiler_params=pltpu.CompilerParams(
            dimension_semantics=("arbitrary", "arbitrary"),
            vmem_limit_bytes=vmem_limit),
    )(adj_p, x_p, pparams["w1"], pparams["w2"], pparams["b2"])

    return out_p[:n, :out_dim]


# ----------------------------------------------------------------------------
# Graph / parameter preparation (done once, outside the per-step forward).
# ----------------------------------------------------------------------------
def build_normalized_adjacency(edge_index, num_nodes, dtype=jnp.bfloat16):
    """Dense D^{-1/2}(A+I)D^{-1/2} matching PyG GCNConv message passing."""
    row, col = edge_index[0], edge_index[1]
    loops = jnp.arange(num_nodes, dtype=edge_index.dtype)
    row = jnp.concatenate([row, loops])
    col = jnp.concatenate([col, loops])
    deg = jnp.zeros((num_nodes,), jnp.float32).at[row].add(1.0)
    dis = jnp.where(deg > 0, jax.lax.rsqrt(deg), 0.0)
    norm = dis[row] * dis[col]
    # out[col] += norm * x[row]  <=>  A_hat[col, row] = norm
    adj = jnp.zeros((num_nodes, num_nodes), jnp.float32).at[col, row].add(norm)
    return adj.astype(dtype)


def prepare_params(params):
    """Pad to lane/MXU-friendly shapes, fold b1 into W1 (ones-column trick), bf16."""
    w1, b1, w2, b2 = params["w1"], params["b1"], params["w2"], params["b2"]
    f, h = w1.shape
    out_dim = w2.shape[1]
    f_pad = _round_up(f + 1, 128)   # +1: room for the ones/bias column
    h_pad = _round_up(h, 128)       # 200 -> 256
    out_pad = _round_up(out_dim, 128)
    w1p = (jnp.zeros((f_pad, h_pad), jnp.float32)
           .at[:f, :h].set(w1)
           .at[f, :h].set(b1))      # b1 lives in row f, paired with X's ones col
    w2p = jnp.zeros((h_pad, out_pad), jnp.float32).at[:h, :out_dim].set(w2)
    b2p = jnp.zeros((1, out_pad), jnp.float32).at[0, :out_dim].set(b2)
    return {
        "w1": w1p.astype(jnp.bfloat16),
        "w2": w2p.astype(jnp.bfloat16),
        "b2": b2p,
        "out_dim": out_dim,
        "ones_col": f,
    }


def init_params(key, num_node_features, hidden=200, out_dim=1):
    k1, k2, k3, k4 = jax.random.split(key, 4)
    bound1 = 1.0 / jnp.sqrt(float(num_node_features))
    bound2 = 1.0 / jnp.sqrt(float(hidden))
    return {
        "w1": jax.random.uniform(k1, (num_node_features, hidden), jnp.float32,
                                 -bound1, bound1),
        "b1": jax.random.uniform(k2, (hidden,), jnp.float32, -bound1, bound1),
        "w2": jax.random.uniform(k3, (hidden, out_dim), jnp.float32,
                                 -bound2, bound2),
        "b2": jax.random.uniform(k4, (out_dim,), jnp.float32, -bound2, bound2),
    }


def net_reg_reference(x, edge_index, params):
    """Pure-JAX f32 reference (eval-mode dropout)."""
    n = x.shape[0]
    adj = build_normalized_adjacency(edge_index, n, dtype=jnp.float32)
    h = jnp.maximum(adj @ (x @ params["w1"] + params["b1"]), 0.0)
    return adj @ (h @ params["w2"] + params["b2"])


def _ring_edge_index(num_nodes):
    src = jnp.arange(num_nodes, dtype=jnp.int32)
    dst = (src + 1) % num_nodes
    return jnp.stack(
        [jnp.concatenate([src, dst]), jnp.concatenate([dst, src])], axis=0)


if __name__ == "__main__":
    key = jax.random.PRNGKey(0)
    kx, kp, kx2 = jax.random.split(key, 3)

    num_node_features = 16
    params = init_params(kp, num_node_features, hidden=200, out_dim=1)
    pparams = prepare_params(params)

    # --- Demo graph (N=8): exercises the small-graph fast path. --------------
    num_nodes = 8
    x = jax.random.normal(kx, (num_nodes, num_node_features), jnp.float32)
    edge_index = _ring_edge_index(num_nodes)
    adj_bf16 = build_normalized_adjacency(edge_index, num_nodes)

    out = net_reg_forward(x, adj_bf16, pparams)
    out = jax.block_until_ready(out)
    assert out.shape == (num_nodes, 1)
    assert bool(jnp.all(jnp.isfinite(out)))
    ref = net_reg_reference(x, edge_index, params)
    assert bool(jnp.allclose(out, ref, rtol=1e-1, atol=1e-1)), (
        f"fast path max abs diff {jnp.max(jnp.abs(out - ref))}")

    # --- Larger graph (N=300): exercises the general two-phase tiled path. ---
    num_nodes2 = 300
    x2 = jax.random.normal(kx2, (num_nodes2, num_node_features), jnp.float32)
    edge_index2 = _ring_edge_index(num_nodes2)
    adj2_bf16 = build_normalized_adjacency(edge_index2, num_nodes2)

    out2 = net_reg_forward(x2, adj2_bf16, pparams, tm=128, force_general=True)
    out2 = jax.block_until_ready(out2)
    assert out2.shape == (num_nodes2, 1)
    assert bool(jnp.all(jnp.isfinite(out2)))
    ref2 = net_reg_reference(x2, edge_index2, params)
    assert bool(jnp.allclose(out2, ref2, rtol=1e-1, atol=1e-1)), (
        f"tiled path max abs diff {jnp.max(jnp.abs(out2 - ref2))}")

    print("KERNEL_OK")
</pallas_src>

<mosaic_0001>
module attributes {stable_mosaic.version = 11 : i64} {
  func.func @_netreg_small_kernel(%arg0: memref<128x128xbf16, #tpu.memory_space<vmem>>, %arg1: memref<128x128xbf16, #tpu.memory_space<vmem>>, %arg2: memref<128x256xbf16, #tpu.memory_space<vmem>>, %arg3: memref<256x128xbf16, #tpu.memory_space<vmem>>, %arg4: memref<1x128xf32, #tpu.memory_space<vmem>>, %arg5: memref<128x128xf32, #tpu.memory_space<vmem>>) attributes {dimension_semantics = [], scalar_prefetch = 0 : i64, scratch_operands = 0 : i64, tpu.core_type = #tpu.core_type<tc>} {
    %c0 = arith.constant 0 : index
    %c0_0 = arith.constant 0 : index
    %0 = vector.load %arg0[%c0, %c0_0] : memref<128x128xbf16, #tpu.memory_space<vmem>>, vector<128x128xbf16>
    %c0_1 = arith.constant 0 : index
    %c0_2 = arith.constant 0 : index
    %1 = vector.load %arg1[%c0_1, %c0_2] : memref<128x128xbf16, #tpu.memory_space<vmem>>, vector<128x128xbf16>
    %cst = arith.constant dense<0.000000e+00> : vector<128x128xf32>
    %2 = tpu.matmul %0, %1, %cst {dimension_numbers = #tpu.dot_dimension_numbers<[1], [0], [0], [1], [0, 0, 1, 1], [], []>} : vector<128x128xbf16>, vector<128x128xbf16>, vector<128x128xf32> -> vector<128x128xf32>
    %3 = arith.truncf %2 : vector<128x128xf32> to vector<128x128xbf16>
    %c0_3 = arith.constant 0 : index
    %c0_4 = arith.constant 0 : index
    %4 = vector.load %arg2[%c0_3, %c0_4] : memref<128x256xbf16, #tpu.memory_space<vmem>>, vector<128x256xbf16>
    %cst_5 = arith.constant dense<0.000000e+00> : vector<128x256xf32>
    %5 = tpu.matmul %3, %4, %cst_5 {dimension_numbers = #tpu.dot_dimension_numbers<[1], [0], [0], [1], [0, 0, 1, 1], [], []>} : vector<128x128xbf16>, vector<128x256xbf16>, vector<128x256xf32> -> vector<128x256xf32>
    %cst_6 = arith.constant 0.000000e+00 : f32
    %6 = vector.broadcast %cst_6 : f32 to vector<128x256xf32>
    %7 = arith.maximumf %5, %6 : vector<128x256xf32>
    %8 = arith.truncf %7 : vector<128x256xf32> to vector<128x256xbf16>
    %c0_7 = arith.constant 0 : index
    %c0_8 = arith.constant 0 : index
    %9 = vector.load %arg3[%c0_7, %c0_8] : memref<256x128xbf16, #tpu.memory_space<vmem>>, vector<256x128xbf16>
    %cst_9 = arith.constant dense<0.000000e+00> : vector<128x128xf32>
    %10 = tpu.matmul %8, %9, %cst_9 {dimension_numbers = #tpu.dot_dimension_numbers<[1], [0], [0], [1], [0, 0, 1, 1], [], []>} : vector<128x256xbf16>, vector<256x128xbf16>, vector<128x128xf32> -> vector<128x128xf32>
    %c0_10 = arith.constant 0 : index
    %c0_11 = arith.constant 0 : index
    %11 = vector.load %arg4[%c0_10, %c0_11] : memref<1x128xf32, #tpu.memory_space<vmem>>, vector<1x128xf32>
    %12 = vector.broadcast %11 : vector<1x128xf32> to vector<128x128xf32>
    %13 = arith.addf %10, %12 : vector<128x128xf32>
    %14 = arith.truncf %13 : vector<128x128xf32> to vector<128x128xbf16>
    %cst_12 = arith.constant dense<0.000000e+00> : vector<128x128xf32>
    %15 = tpu.matmul %0, %14, %cst_12 {dimension_numbers = #tpu.dot_dimension_numbers<[1], [0], [0], [1], [0, 0, 1, 1], [], []>} : vector<128x128xbf16>, vector<128x128xbf16>, vector<128x128xf32> -> vector<128x128xf32>
    %c0_13 = arith.constant 0 : index
    %c0_14 = arith.constant 0 : index
    %16 = vector.load %arg5[%c0_13, %c0_14] : memref<128x128xf32, #tpu.memory_space<vmem>>, vector<128x128xf32>
    tpu.vector_store %arg5[%c0_13, %c0_14], %15 {strides = array<i32>} : memref<128x128xf32, #tpu.memory_space<vmem>>, vector<128x128xf32>,
    return
  }
}

</mosaic_0001>

<llo_original>
// kernel: tpu_custom_call.1
$region0: #{tpu_custom_call.1}
  #allocation0 [shape = 'u32[]', space=smem, size = 0x4, offset = 0x4, fixed_abs, tag = 'smem constant byte address 0x4 - core index']
  #allocation1 [shape = 'u32[72,128]{1,0:T(1,128)}', space=vmem, size = 0x9000, scoped, tag = 'internal scratch']
  %s0 = inlined_call_operand.hbm [shape: bf16[128,128], index: 0, kind: input, shape index: {}]
  %s1 = inlined_call_operand.hbm [shape: bf16[128,128], index: 1, kind: input, shape index: {}]
  %s2 = inlined_call_operand.hbm [shape: bf16[128,256], index: 2, kind: input, shape index: {}]
  %s3 = inlined_call_operand.hbm [shape: bf16[256,128], index: 3, kind: input, shape index: {}]
  %s4 = inlined_call_operand.vmem [shape: f32[1,128], index: 4, kind: input, shape index: {}]
  %s5 = inlined_call_operand.hbm [shape: f32[128,128], index: 5, kind: output, shape index: {}]
  %s6 = sld [smem:[#allocation0]]
  $region46: #{tpu_custom_call.1} parent=0
    _
  %s8 = ssub.s32 1, %s6
  %s9 = scalar_select 0, %s8, %s6
  $region1: #{tpu_custom_call.1} parent=0
    #allocation2 [shape = 'u8[32768]{0}', space=vmem, size = 0x8000, scoped, tag = 'input window, operand 0, single buffered']
    #allocation3 [shape = 's32[1]{0}', space=sflag, size = 0x4, scoped, tag = 'scoped memory for tpu_custom_call.1']
    #allocation4 [shape = 's32[1]{0}', space=sflag, size = 0x4, scoped, tag = 'scoped memory for tpu_custom_call.1']
    #allocation5 [shape = 'u8[32768]{0}', space=vmem, size = 0x8000, scoped, tag = 'input window, operand 1, single buffered']
    #allocation6 [shape = 's32[1]{0}', space=sflag, size = 0x4, scoped, tag = 'scoped memory for tpu_custom_call.1']
    #allocation7 [shape = 'u8[65536]{0}', space=vmem, size = 0x10000, scoped, tag = 'input window, operand 2, single buffered']
    #allocation8 [shape = 'u8[65536]{0}', space=vmem, size = 0x10000, scoped, tag = 'input window, operand 3, single buffered']
    #allocation9 [shape = 's32[1]{0}', space=sflag, size = 0x4, scoped, tag = 'scoped memory for tpu_custom_call.1']
    #allocation10 [shape = 'u8[65536]{0}', space=vmem, size = 0x10000, scoped, tag = 'output window, operand 0, single buffered']
    %10 = vsyncpa [#allocation3], 0
    %11 = vsyncpa [#allocation6], 0
    %12 = vsyncpa [#allocation9], 0
    %13 = vsyncpa [#allocation4], 0
    // Predicated region
    $region2: #{tpu_custom_call.1} parent=1 // pred_check
      _
    $region3: #{tpu_custom_call.1} parent=1 // pred_check_branch
      %15 = sbr.rel (0) target = $region5
    $region4: #{tpu_custom_call.1} parent=1 // pred_region
      %17 = vsyncadd [#allocation3], 0
      %s18 = sshll.u32 %s0, 4
      %s19 = int_to_ptr.hbm [resolvable:$true] %s18
      %s20 = sshll.u32 [#allocation2], 4
      %s21 = int_to_ptr.vmem [resolvable:$true] %s20
      %26 = dma.hbm_to_vmem [thread:$0]  %s19, 1024, %s21, [#allocation3], 64, 64, 4
    $region5: #{tpu_custom_call.1} parent=1 // pred_fallthru
      _
    // Predicated region
    $region6: #{tpu_custom_call.1} parent=1 // pred_check
      _
    $region7: #{tpu_custom_call.1} parent=1 // pred_check_branch
      %28 = sbr.rel (0) target = $region9
    $region8: #{tpu_custom_call.1} parent=1 // pred_region
      %30 = vsyncadd [#allocation6], 0
      %s31 = sshll.u32 %s1, 4
      %s32 = int_to_ptr.hbm [resolvable:$true] %s31
      %s33 = sshll.u32 [#allocation5], 4
      %s34 = int_to_ptr.vmem [resolvable:$true] %s33
      %39 = dma.hbm_to_vmem [thread:$0]  %s32, 1024, %s34, [#allocation6], 64, 64, 4
    $region9: #{tpu_custom_call.1} parent=1 // pred_fallthru
      _
    // Predicated region
    $region10: #{tpu_custom_call.1} parent=1 // pred_check
      _
    $region11: #{tpu_custom_call.1} parent=1 // pred_check_branch
      %41 = sbr.rel (0) target = $region13
    $region12: #{tpu_custom_call.1} parent=1 // pred_region
      %43 = vsyncadd [#allocation6], 0
      %s44 = sshll.u32 %s2, 4
      %s45 = int_to_ptr.hbm [resolvable:$true] %s44
      %s46 = sshll.u32 [#allocation7], 4
      %s47 = int_to_ptr.vmem [resolvable:$true] %s46
      %52 = dma.hbm_to_vmem [thread:$0]  %s45, 2048, %s47, [#allocation6], 128, 128, 8
    $region13: #{tpu_custom_call.1} parent=1 // pred_fallthru
      _
    // Predicated region
    $region14: #{tpu_custom_call.1} parent=1 // pred_check
      _
    $region15: #{tpu_custom_call.1} parent=1 // pred_check_branch
      %54 = sbr.rel (0) target = $region17
    $region16: #{tpu_custom_call.1} parent=1 // pred_region
      %56 = vsyncadd [#allocation9], 0
      %s57 = sshll.u32 %s3, 4
      %s58 = int_to_ptr.hbm [resolvable:$true] %s57
      %s59 = sshll.u32 [#allocation8], 4
      %s60 = int_to_ptr.vmem [resolvable:$true] %s59
      %65 = dma.hbm_to_vmem [thread:$0]  %s58, 2048, %s60, [#allocation9], 64, 64, 4
    $region17: #{tpu_custom_call.1} parent=1 // pred_fallthru
      _
    // Predicated region
    $region18: #{tpu_custom_call.1} parent=1 // pred_check
      _
    $region19: #{tpu_custom_call.1} parent=1 // pred_check_branch
      %67 = sbr.rel (0) target = $region21
    $region20: #{tpu_custom_call.1} parent=1 // pred_region
      _
    $region21: #{tpu_custom_call.1} parent=1 // pred_fallthru
      _
    // Predicated region
    $region22: #{tpu_custom_call.1} parent=1 // pred_check
      _
    $region23: #{tpu_custom_call.1} parent=1 // pred_check_branch
      %69 = sbr.rel (0) target = $region25
    $region24: #{tpu_custom_call.1} parent=1 // pred_region
      %71 = dma.done [#allocation3], 1024
    $region25: #{tpu_custom_call.1} parent=1 // pred_fallthru
      _
    // Predicated region
    $region26: #{tpu_custom_call.1} parent=1 // pred_check
      _
    $region27: #{tpu_custom_call.1} parent=1 // pred_check_branch
      %73 = sbr.rel (0) target = $region29
    $region28: #{tpu_custom_call.1} parent=1 // pred_region
      %75 = dma.done [#allocation6], 1024
    $region29: #{tpu_custom_call.1} parent=1 // pred_fallthru
      _
    // Predicated region
    $region30: #{tpu_custom_call.1} parent=1 // pred_check
      _
    $region31: #{tpu_custom_call.1} parent=1 // pred_check_branch
      %77 = sbr.rel (0) target = $region33
    $region32: #{tpu_custom_call.1} parent=1 // pred_region
      %79 = dma.done [#allocation6], 2048
    $region33: #{tpu_custom_call.1} parent=1 // pred_fallthru
      _
    // Predicated region
    $region34: #{tpu_custom_call.1} parent=1 // pred_check
      _
    $region35: #{tpu_custom_call.1} parent=1 // pred_check_branch
      %81 = sbr.rel (0) target = $region37
    $region36: #{tpu_custom_call.1} parent=1 // pred_region
      %83 = dma.done [#allocation9], 2048
    $region37: #{tpu_custom_call.1} parent=1 // pred_fallthru
      _
    %v84 = vld [vmem:[#allocation2] sm:$0xf]
    %v85 = vld [vmem:[#allocation2 + $0x4] sm:$0xf]
    %v86 = vld [vmem:[#allocation2 + $0x8] sm:$0xf]
    %v87 = vld [vmem:[#allocation2 + $0xc] sm:$0xf]
    %v88 = vld [vmem:[#allocation2 + $0x10] sm:$0xf]
    %v89 = vld [vmem:[#allocation2 + $0x14] sm:$0xf]
    %v90 = vld [vmem:[#allocation2 + $0x18] sm:$0xf]
    %v91 = vld [vmem:[#allocation2 + $0x1c] sm:$0xf]
    %v92 = vld [vmem:[#allocation2 + $0x20] sm:$0xf]
    %v93 = vld [vmem:[#allocation2 + $0x24] sm:$0xf]
    %v94 = vld [vmem:[#allocation2 + $0x28] sm:$0xf]
    %v95 = vld [vmem:[#allocation2 + $0x2c] sm:$0xf]
    %v96 = vld [vmem:[#allocation2 + $0x30] sm:$0xf]
    %v97 = vld [vmem:[#allocation2 + $0x34] sm:$0xf]
    %v98 = vld [vmem:[#allocation2 + $0x38] sm:$0xf]
    %v99 = vld [vmem:[#allocation2 + $0x3c] sm:$0xf]
    %v100 = vld [vmem:[#allocation5] sm:$0xf]
    %v101 = vld [vmem:[#allocation5 + $0x4] sm:$0xf]
    %v102 = vld [vmem:[#allocation5 + $0x8] sm:$0xf]
    %v103 = vld [vmem:[#allocation5 + $0xc] sm:$0xf]
    %v104 = vld [vmem:[#allocation5 + $0x10] sm:$0xf]
    %v105 = vld [vmem:[#allocation5 + $0x14] sm:$0xf]
    %v106 = vld [vmem:[#allocation5 + $0x18] sm:$0xf]
    %v107 = vld [vmem:[#allocation5 + $0x1c] sm:$0xf]
    %v108 = vld [vmem:[#allocation5 + $0x20] sm:$0xf]
    %v109 = vld [vmem:[#allocation5 + $0x24] sm:$0xf]
    %v110 = vld [vmem:[#allocation5 + $0x28] sm:$0xf]
    %v111 = vld [vmem:[#allocation5 + $0x2c] sm:$0xf]
    %v112 = vld [vmem:[#allocation5 + $0x30] sm:$0xf]
    %v113 = vld [vmem:[#allocation5 + $0x34] sm:$0xf]
    %v114 = vld [vmem:[#allocation5 + $0x38] sm:$0xf]
    %v115 = vld [vmem:[#allocation5 + $0x3c] sm:$0xf]
    %v132 = vunpack.c.l.b16 %v84
    %v133 = vunpack.c.l.b16 %v85
    %v134 = vunpack.c.l.b16 %v86
    %v135 = vunpack.c.l.b16 %v87
    %v136 = vunpack.c.l.b16 %v88
    %v137 = vunpack.c.l.b16 %v89
    %v138 = vunpack.c.l.b16 %v90
    %v139 = vunpack.c.l.b16 %v91
    %v140 = vunpack.c.l.b16 %v92
    %v141 = vunpack.c.l.b16 %v93
    %v142 = vunpack.c.l.b16 %v94
    %v143 = vunpack.c.l.b16 %v95
    %v144 = vunpack.c.l.b16 %v96
    %v145 = vunpack.c.l.b16 %v97
    %v146 = vunpack.c.l.b16 %v98
    %v147 = vunpack.c.l.b16 %v99
    %v148 = vpack.c.b16 %v133, %v132
    %v149 = vpack.c.b16 %v135, %v134
    %v150 = vpack.c.b16 %v137, %v136
    %v151 = vpack.c.b16 %v139, %v138
    %v152 = vpack.c.b16 %v141, %v140
    %v153 = vpack.c.b16 %v143, %v142
    %v154 = vpack.c.b16 %v145, %v144
    %v155 = vpack.c.b16 %v147, %v146
    %v180 = vunpack.c.l.b16 %v100
    %v181 = vunpack.c.l.b16 %v101
    %v182 = vunpack.c.l.b16 %v102
    %v183 = vunpack.c.l.b16 %v103
    %v184 = vunpack.c.l.b16 %v104
    %v185 = vunpack.c.l.b16 %v105
    %v186 = vunpack.c.l.b16 %v106
    %v187 = vunpack.c.l.b16 %v107
    %v188 = vunpack.c.l.b16 %v108
    %v189 = vunpack.c.l.b16 %v109
    %v190 = vunpack.c.l.b16 %v110
    %v191 = vunpack.c.l.b16 %v111
    %v192 = vunpack.c.l.b16 %v112
    %v193 = vunpack.c.l.b16 %v113
    %v194 = vunpack.c.l.b16 %v114
    %v195 = vunpack.c.l.b16 %v115
    %v196 = vpack.c.b16 %v181, %v180
    %v197 = vpack.c.b16 %v183, %v182
    %v198 = vpack.c.b16 %v185, %v184
    %v199 = vpack.c.b16 %v187, %v186
    %v200 = vpack.c.b16 %v189, %v188
    %v201 = vpack.c.b16 %v191, %v190
    %v202 = vpack.c.b16 %v193, %v192
    %v203 = vpack.c.b16 %v195, %v194
    %212 = vmatpush.bf16.msra.mxu0 %v203
    %213 = vmatpush.bf16.msra.mxu0 %v202
    %214 = vmatpush.bf16.msra.mxu0 %v201
    %215 = vmatpush.bf16.msra.mxu0 %v200
    %216 = vmatpush.bf16.msra.mxu0 %v199
    %217 = vmatpush.bf16.msra.mxu0 %v198
    %218 = vmatpush.bf16.msra.mxu0 %v197
    %219 = vmatpush.bf16.msra.mxu0 %v196
    %220 = vmatmul.bf16.gmra.mxu0 %v148
    %v221 = vpop.f32.mrf.mxu0
    %v222 = vadd.f32 0.0, %v221
    %v223 = vpop.f32.mrf.mxu0
    %v224 = vadd.f32 0.0, %v223
    %225 = vmatmul.bf16.gmra.mxu0 %v149
    %v226 = vpop.f32.mrf.mxu0
    %v227 = vadd.f32 0.0, %v226
    %v228 = vpop.f32.mrf.mxu0
    %v229 = vadd.f32 0.0, %v228
    %230 = vmatmul.bf16.gmra.mxu0 %v150
    %v231 = vpop.f32.mrf.mxu0
    %v232 = vadd.f32 0.0, %v231
    %v233 = vpop.f32.mrf.mxu0
    %v234 = vadd.f32 0.0, %v233
    %235 = vmatmul.bf16.gmra.mxu0 %v151
    %v236 = vpop.f32.mrf.mxu0
    %v237 = vadd.f32 0.0, %v236
    %v238 = vpop.f32.mrf.mxu0
    %v239 = vadd.f32 0.0, %v238
    %240 = vmatmul.bf16.gmra.mxu0 %v152
    %v241 = vpop.f32.mrf.mxu0
    %v242 = vadd.f32 0.0, %v241
    %v243 = vpop.f32.mrf.mxu0
    %v244 = vadd.f32 0.0, %v243
    %245 = vmatmul.bf16.gmra.mxu0 %v153
    %v246 = vpop.f32.mrf.mxu0
    %v247 = vadd.f32 0.0, %v246
    %v248 = vpop.f32.mrf.mxu0
    %v249 = vadd.f32 0.0, %v248
    %250 = vmatmul.bf16.gmra.mxu0 %v154
    %v251 = vpop.f32.mrf.mxu0
    %v252 = vadd.f32 0.0, %v251
    %v253 = vpop.f32.mrf.mxu0
    %v254 = vadd.f32 0.0, %v253
    %255 = vmatmul.bf16.gmra.mxu0 %v155
    %v256 = vpop.f32.mrf.mxu0
    %v257 = vadd.f32 0.0, %v256
    %v258 = vpop.f32.mrf.mxu0
    %v259 = vadd.f32 0.0, %v258
    %260 = vdwg.mxu0
    %v261 = vpack.c.bf16 %v224, %v222
    %v262 = vpack.c.bf16 %v229, %v227
    %v263 = vpack.c.bf16 %v234, %v232
    %v264 = vpack.c.bf16 %v239, %v237
    %v265 = vpack.c.bf16 %v244, %v242
    %v266 = vpack.c.bf16 %v249, %v247
    %v267 = vpack.c.bf16 %v254, %v252
    %v268 = vpack.c.bf16 %v259, %v257
    %v269 = vld [vmem:[#allocation7] sm:$0xff]
    %v270 = vld [vmem:[#allocation7 + $0x8] sm:$0xff]
    %v271 = vld [vmem:[#allocation7 + $0x10] sm:$0xff]
    %v272 = vld [vmem:[#allocation7 + $0x18] sm:$0xff]
    %v273 = vld [vmem:[#allocation7 + $0x20] sm:$0xff]
    %v274 = vld [vmem:[#allocation7 + $0x28] sm:$0xff]
    %v275 = vld [vmem:[#allocation7 + $0x30] sm:$0xff]
    %v276 = vld [vmem:[#allocation7 + $0x38] sm:$0xff]
    %v277 = vld [vmem:[#allocation7 + $0x40] sm:$0xff]
    %v278 = vld [vmem:[#allocation7 + $0x48] sm:$0xff]
    %v279 = vld [vmem:[#allocation7 + $0x50] sm:$0xff]
    %v280 = vld [vmem:[#allocation7 + $0x58] sm:$0xff]
    %v281 = vld [vmem:[#allocation7 + $0x60] sm:$0xff]
    %v282 = vld [vmem:[#allocation7 + $0x68] sm:$0xff]
    %v283 = vld [vmem:[#allocation7 + $0x70] sm:$0xff]
    %v284 = vld [vmem:[#allocation7 + $0x78] sm:$0xff]
    %v301 = vunpack.c.l.b16 %v269
    %v302 = vunpack.c.h.b16 %v269
    %v303 = vunpack.c.l.b16 %v270
    %v304 = vunpack.c.h.b16 %v270
    %v305 = vunpack.c.l.b16 %v271
    %v306 = vunpack.c.h.b16 %v271
    %v307 = vunpack.c.l.b16 %v272
    %v308 = vunpack.c.h.b16 %v272
    %v309 = vunpack.c.l.b16 %v273
    %v310 = vunpack.c.h.b16 %v273
    %v311 = vunpack.c.l.b16 %v274
    %v312 = vunpack.c.h.b16 %v274
    %v313 = vunpack.c.l.b16 %v275
    %v314 = vunpack.c.h.b16 %v275
    %v315 = vunpack.c.l.b16 %v276
    %v316 = vunpack.c.h.b16 %v276
    %v317 = vunpack.c.l.b16 %v277
    %v318 = vunpack.c.h.b16 %v277
    %v319 = vunpack.c.l.b16 %v278
    %v320 = vunpack.c.h.b16 %v278
    %v321 = vunpack.c.l.b16 %v279
    %v322 = vunpack.c.h.b16 %v279
    %v323 = vunpack.c.l.b16 %v280
    %v324 = vunpack.c.h.b16 %v280
    %v325 = vunpack.c.l.b16 %v281
    %v326 = vunpack.c.h.b16 %v281
    %v327 = vunpack.c.l.b16 %v282
    %v328 = vunpack.c.h.b16 %v282
    %v329 = vunpack.c.l.b16 %v283
    %v330 = vunpack.c.h.b16 %v283
    %v331 = vunpack.c.l.b16 %v284
    %v332 = vunpack.c.h.b16 %v284
    %v333 = vpack.c.b16 %v303, %v301
    %v334 = vpack.c.b16 %v304, %v302
    %v335 = vpack.c.b16 %v307, %v305
    %v336 = vpack.c.b16 %v308, %v306
    %v337 = vpack.c.b16 %v311, %v309
    %v338 = vpack.c.b16 %v312, %v310
    %v339 = vpack.c.b16 %v315, %v313
    %v340 = vpack.c.b16 %v316, %v314
    %v341 = vpack.c.b16 %v319, %v317
    %v342 = vpack.c.b16 %v320, %v318
    %v343 = vpack.c.b16 %v323, %v321
    %v344 = vpack.c.b16 %v324, %v322
    %v345 = vpack.c.b16 %v327, %v325
    %v346 = vpack.c.b16 %v328, %v326
    %v347 = vpack.c.b16 %v331, %v329
    %v348 = vpack.c.b16 %v332, %v330
    %365 = vmatpush.bf16.msra.mxu0 %v347
    %366 = vmatpush.bf16.msra.mxu0 %v345
    %367 = vmatpush.bf16.msra.mxu0 %v343
    %368 = vmatpush.bf16.msra.mxu0 %v341
    %369 = vmatpush.bf16.msra.mxu0 %v339
    %370 = vmatpush.bf16.msra.mxu0 %v337
    %371 = vmatpush.bf16.msra.mxu0 %v335
    %372 = vmatpush.bf16.msra.mxu0 %v333
    %373 = vmatmul.bf16.gmra.mxu0 %v261
    %v374 = vpop.f32.mrf.mxu0
    %v375 = vadd.f32 0.0, %v374
    %v376 = vpop.f32.mrf.mxu0
    %v377 = vadd.f32 0.0, %v376
    %378 = vmatmul.bf16.gmra.mxu0 %v262
    %v379 = vpop.f32.mrf.mxu0
    %v380 = vadd.f32 0.0, %v379
    %v381 = vpop.f32.mrf.mxu0
    %v382 = vadd.f32 0.0, %v381
    %383 = vmatmul.bf16.gmra.mxu0 %v263
    %v384 = vpop.f32.mrf.mxu0
    %v385 = vadd.f32 0.0, %v384
    %v386 = vpop.f32.mrf.mxu0
    %v387 = vadd.f32 0.0, %v386
    %388 = vmatmul.bf16.gmra.mxu0 %v264
    %v389 = vpop.f32.mrf.mxu0
    %v390 = vadd.f32 0.0, %v389
    %v391 = vpop.f32.mrf.mxu0
    %v392 = vadd.f32 0.0, %v391
    %393 = vmatmul.bf16.gmra.mxu0 %v265
    %v394 = vpop.f32.mrf.mxu0
    %v395 = vadd.f32 0.0, %v394
    %v396 = vpop.f32.mrf.mxu0
    %v397 = vadd.f32 0.0, %v396
    %398 = vmatmul.bf16.gmra.mxu0 %v266
    %v399 = vpop.f32.mrf.mxu0
    %v400 = vadd.f32 0.0, %v399
    %v401 = vpop.f32.mrf.mxu0
    %v402 = vadd.f32 0.0, %v401
    %403 = vmatmul.bf16.gmra.mxu0 %v267
    %v404 = vpop.f32.mrf.mxu0
    %v405 = vadd.f32 0.0, %v404
    %v406 = vpop.f32.mrf.mxu0
    %v407 = vadd.f32 0.0, %v406
    %408 = vmatmul.bf16.gmra.mxu0 %v268
    %v409 = vpop.f32.mrf.mxu0
    %v410 = vadd.f32 0.0, %v409
    %v411 = vpop.f32.mrf.mxu0
    %v412 = vadd.f32 0.0, %v411
    %413 = vdwg.mxu0
    %414 = vmatpush.bf16.msra.mxu0 %v348
    %415 = vmatpush.bf16.msra.mxu0 %v346
    %416 = vmatpush.bf16.msra.mxu0 %v344
    %417 = vmatpush.bf16.msra.mxu0 %v342
    %418 = vmatpush.bf16.msra.mxu0 %v340
    %419 = vmatpush.bf16.msra.mxu0 %v338
    %420 = vmatpush.bf16.msra.mxu0 %v336
    %421 = vmatpush.bf16.msra.mxu0 %v334
    %422 = vmatmul.bf16.gmra.mxu0 %v261
    %v423 = vpop.f32.mrf.mxu0
    %v424 = vadd.f32 0.0, %v423
    %v425 = vpop.f32.mrf.mxu0
    %v426 = vadd.f32 0.0, %v425
    %427 = vmatmul.bf16.gmra.mxu0 %v262
    %v428 = vpop.f32.mrf.mxu0
    %v429 = vadd.f32 0.0, %v428
    %v430 = vpop.f32.mrf.mxu0
    %v431 = vadd.f32 0.0, %v430
    %432 = vmatmul.bf16.gmra.mxu0 %v263
    %v433 = vpop.f32.mrf.mxu0
    %v434 = vadd.f32 0.0, %v433
    %v435 = vpop.f32.mrf.mxu0
    %v436 = vadd.f32 0.0, %v435
    %437 = vmatmul.bf16.gmra.mxu0 %v264
    %v438 = vpop.f32.mrf.mxu0
    %v439 = vadd.f32 0.0, %v438
    %v440 = vpop.f32.mrf.mxu0
    %v441 = vadd.f32 0.0, %v440
    %442 = vmatmul.bf16.gmra.mxu0 %v265
    %v443 = vpop.f32.mrf.mxu0
    %v444 = vadd.f32 0.0, %v443
    %v445 = vpop.f32.mrf.mxu0
    %v446 = vadd.f32 0.0, %v445
    %447 = vmatmul.bf16.gmra.mxu0 %v266
    %v448 = vpop.f32.mrf.mxu0
    %v449 = vadd.f32 0.0, %v448
    %v450 = vpop.f32.mrf.mxu0
    %v451 = vadd.f32 0.0, %v450
    %452 = vmatmul.bf16.gmra.mxu0 %v267
    %v453 = vpop.f32.mrf.mxu0
    %v454 = vadd.f32 0.0, %v453
    %v455 = vpop.f32.mrf.mxu0
    %v456 = vadd.f32 0.0, %v455
    %457 = vmatmul.bf16.gmra.mxu0 %v268
    %v458 = vpop.f32.mrf.mxu0
    %v459 = vadd.f32 0.0, %v458
    %v460 = vpop.f32.mrf.mxu0
    %v461 = vadd.f32 0.0, %v460
    %462 = vdwg.mxu0
    %v463 = vmax.f32 %v375, 0.0
    %v464 = vmax.f32 %v424, 0.0
    %v465 = vmax.f32 %v377, 0.0
    %v466 = vmax.f32 %v426, 0.0
    %v467 = vmax.f32 %v380, 0.0
    %v468 = vmax.f32 %v429, 0.0
    %v469 = vmax.f32 %v382, 0.0
    %v470 = vmax.f32 %v431, 0.0
    %v471 = vmax.f32 %v385, 0.0
    %v472 = vmax.f32 %v434, 0.0
    %v473 = vmax.f32 %v387, 0.0
    %v474 = vmax.f32 %v436, 0.0
    %v475 = vmax.f32 %v390, 0.0
    %v476 = vmax.f32 %v439, 0.0
    %v477 = vmax.f32 %v392, 0.0
    %v478 = vmax.f32 %v441, 0.0
    %v479 = vmax.f32 %v395, 0.0
    %v480 = vmax.f32 %v444, 0.0
    %v481 = vmax.f32 %v397, 0.0
    %v482 = vmax.f32 %v446, 0.0
    %v483 = vmax.f32 %v400, 0.0
    %v484 = vmax.f32 %v449, 0.0
    %v485 = vmax.f32 %v402, 0.0
    %v486 = vmax.f32 %v451, 0.0
    %v487 = vmax.f32 %v405, 0.0
    %v488 = vmax.f32 %v454, 0.0
    %v489 = vmax.f32 %v407, 0.0
    %v490 = vmax.f32 %v456, 0.0
    %v491 = vmax.f32 %v410, 0.0
    %v492 = vmax.f32 %v459, 0.0
    %v493 = vmax.f32 %v412, 0.0
    %v494 = vmax.f32 %v461, 0.0
    %v495 = vpack.c.bf16 %v465, %v463
    %v496 = vpack.c.bf16 %v466, %v464
    %v497 = vpack.c.bf16 %v469, %v467
    %v498 = vpack.c.bf16 %v470, %v468
    %v499 = vpack.c.bf16 %v473, %v471
    %v500 = vpack.c.bf16 %v474, %v472
    %v501 = vpack.c.bf16 %v477, %v475
    %v502 = vpack.c.bf16 %v478, %v476
    %v503 = vpack.c.bf16 %v481, %v479
    %v504 = vpack.c.bf16 %v482, %v480
    %v505 = vpack.c.bf16 %v485, %v483
    %v506 = vpack.c.bf16 %v486, %v484
    %v507 = vpack.c.bf16 %v489, %v487
    %v508 = vpack.c.bf16 %v490, %v488
    %v509 = vpack.c.bf16 %v493, %v491
    %v510 = vpack.c.bf16 %v494, %v492
    %v511 = vld [vmem:[#allocation8] sm:$0xf]
    %v512 = vld [vmem:[#allocation8 + $0x4] sm:$0xf]
    %v513 = vld [vmem:[#allocation8 + $0x8] sm:$0xf]
    %v514 = vld [vmem:[#allocation8 + $0xc] sm:$0xf]
    %v515 = vld [vmem:[#allocation8 + $0x10] sm:$0xf]
    %v516 = vld [vmem:[#allocation8 + $0x14] sm:$0xf]
    %v517 = vld [vmem:[#allocation8 + $0x18] sm:$0xf]
    %v518 = vld [vmem:[#allocation8 + $0x1c] sm:$0xf]
    %v519 = vld [vmem:[#allocation8 + $0x20] sm:$0xf]
    %v520 = vld [vmem:[#allocation8 + $0x24] sm:$0xf]
    %v521 = vld [vmem:[#allocation8 + $0x28] sm:$0xf]
    %v522 = vld [vmem:[#allocation8 + $0x2c] sm:$0xf]
    %v523 = vld [vmem:[#allocation8 + $0x30] sm:$0xf]
    %v524 = vld [vmem:[#allocation8 + $0x34] sm:$0xf]
    %v525 = vld [vmem:[#allocation8 + $0x38] sm:$0xf]
    %v526 = vld [vmem:[#allocation8 + $0x3c] sm:$0xf]
    %v527 = vld [vmem:[#allocation8 + $0x40] sm:$0xf]
    %v528 = vld [vmem:[#allocation8 + $0x44] sm:$0xf]
    %v529 = vld [vmem:[#allocation8 + $0x48] sm:$0xf]
    %v530 = vld [vmem:[#allocation8 + $0x4c] sm:$0xf]
    %v531 = vld [vmem:[#allocation8 + $0x50] sm:$0xf]
    %v532 = vld [vmem:[#allocation8 + $0x54] sm:$0xf]
    %v533 = vld [vmem:[#allocation8 + $0x58] sm:$0xf]
    %v534 = vld [vmem:[#allocation8 + $0x5c] sm:$0xf]
    %v535 = vld [vmem:[#allocation8 + $0x60] sm:$0xf]
    %v536 = vld [vmem:[#allocation8 + $0x64] sm:$0xf]
    %v537 = vld [vmem:[#allocation8 + $0x68] sm:$0xf]
    %v538 = vld [vmem:[#allocation8 + $0x6c] sm:$0xf]
    %v539 = vld [vmem:[#allocation8 + $0x70] sm:$0xf]
    %v540 = vld [vmem:[#allocation8 + $0x74] sm:$0xf]
    %v541 = vld [vmem:[#allocation8 + $0x78] sm:$0xf]
    %v542 = vld [vmem:[#allocation8 + $0x7c] sm:$0xf]
    %v543 = vld [vmem:[%s4] sm:$0x1]
    %v545 = vperm.slane %v543, 0
    %v579 = vunpack.c.l.b16 %v511
    %v580 = vunpack.c.l.b16 %v512
    %v581 = vunpack.c.l.b16 %v513
    %v582 = vunpack.c.l.b16 %v514
    %v583 = vunpack.c.l.b16 %v515
    %v584 = vunpack.c.l.b16 %v516
    %v585 = vunpack.c.l.b16 %v517
    %v586 = vunpack.c.l.b16 %v518
    %v587 = vunpack.c.l.b16 %v519
    %v588 = vunpack.c.l.b16 %v520
    %v589 = vunpack.c.l.b16 %v521
    %v590 = vunpack.c.l.b16 %v522
    %v591 = vunpack.c.l.b16 %v523
    %v592 = vunpack.c.l.b16 %v524
    %v593 = vunpack.c.l.b16 %v525
    %v594 = vunpack.c.l.b16 %v526
    %v595 = vunpack.c.l.b16 %v527
    %v596 = vunpack.c.l.b16 %v528
    %v597 = vunpack.c.l.b16 %v529
    %v598 = vunpack.c.l.b16 %v530
    %v599 = vunpack.c.l.b16 %v531
    %v600 = vunpack.c.l.b16 %v532
    %v601 = vunpack.c.l.b16 %v533
    %v602 = vunpack.c.l.b16 %v534
    %v603 = vunpack.c.l.b16 %v535
    %v604 = vunpack.c.l.b16 %v536
    %v605 = vunpack.c.l.b16 %v537
    %v606 = vunpack.c.l.b16 %v538
    %v607 = vunpack.c.l.b16 %v539
    %v608 = vunpack.c.l.b16 %v540
    %v609 = vunpack.c.l.b16 %v541
    %v610 = vunpack.c.l.b16 %v542
    %v611 = vpack.c.b16 %v580, %v579
    %v612 = vpack.c.b16 %v582, %v581
    %v613 = vpack.c.b16 %v584, %v583
    %v614 = vpack.c.b16 %v586, %v585
    %v615 = vpack.c.b16 %v588, %v587
    %v616 = vpack.c.b16 %v590, %v589
    %v617 = vpack.c.b16 %v592, %v591
    %v618 = vpack.c.b16 %v594, %v593
    %v619 = vpack.c.b16 %v596, %v595
    %v620 = vpack.c.b16 %v598, %v597
    %v621 = vpack.c.b16 %v600, %v599
    %v622 = vpack.c.b16 %v602, %v601
    %v623 = vpack.c.b16 %v604, %v603
    %v624 = vpack.c.b16 %v606, %v605
    %v625 = vpack.c.b16 %v608, %v607
    %v626 = vpack.c.b16 %v610, %v609
    %643 = vmatpush.bf16.msra.mxu0 %v618
    %644 = vmatpush.bf16.msra.mxu0 %v617
    %645 = vmatpush.bf16.msra.mxu0 %v616
    %646 = vmatpush.bf16.msra.mxu0 %v615
    %647 = vmatpush.bf16.msra.mxu0 %v614
    %648 = vmatpush.bf16.msra.mxu0 %v613
    %649 = vmatpush.bf16.msra.mxu0 %v612
    %650 = vmatpush.bf16.msra.mxu0 %v611
    %651 = vmatmul.bf16.gmra.mxu0 %v495
    %v652 = vpop.f32.mrf.mxu0
    %v653 = vadd.f32 %v545, %v652
    %v654 = vpop.f32.mrf.mxu0
    %v655 = vadd.f32 %v545, %v654
    %656 = vmatmul.bf16.gmra.mxu0 %v497
    %v657 = vpop.f32.mrf.mxu0
    %v658 = vadd.f32 %v545, %v657
    %v659 = vpop.f32.mrf.mxu0
    %v660 = vadd.f32 %v545, %v659
    %661 = vmatmul.bf16.gmra.mxu0 %v499
    %v662 = vpop.f32.mrf.mxu0
    %v663 = vadd.f32 %v545, %v662
    %v664 = vpop.f32.mrf.mxu0
    %v665 = vadd.f32 %v545, %v664
    %666 = vmatmul.bf16.gmra.mxu0 %v501
    %v667 = vpop.f32.mrf.mxu0
    %v668 = vadd.f32 %v545, %v667
    %v669 = vpop.f32.mrf.mxu0
    %v670 = vadd.f32 %v545, %v669
    %671 = vmatmul.bf16.gmra.mxu0 %v503
    %v672 = vpop.f32.mrf.mxu0
    %v673 = vadd.f32 %v545, %v672
    %v674 = vpop.f32.mrf.mxu0
    %v675 = vadd.f32 %v545, %v674
    %676 = vmatmul.bf16.gmra.mxu0 %v505
    %v677 = vpop.f32.mrf.mxu0
    %v678 = vadd.f32 %v545, %v677
    %v679 = vpop.f32.mrf.mxu0
    %v680 = vadd.f32 %v545, %v679
    %681 = vmatmul.bf16.gmra.mxu0 %v507
    %v682 = vpop.f32.mrf.mxu0
    %v683 = vadd.f32 %v545, %v682
    %v684 = vpop.f32.mrf.mxu0
    %v685 = vadd.f32 %v545, %v684
    %686 = vmatmul.bf16.gmra.mxu0 %v509
    %v687 = vpop.f32.mrf.mxu0
    %v688 = vadd.f32 %v545, %v687
    %v689 = vpop.f32.mrf.mxu0
    %v690 = vadd.f32 %v545, %v689
    %691 = vdwg.mxu0
    %692 = vmatpush.bf16.msra.mxu0 %v626
    %693 = vmatpush.bf16.msra.mxu0 %v625
    %694 = vmatpush.bf16.msra.mxu0 %v624
    %695 = vmatpush.bf16.msra.mxu0 %v623
    %696 = vmatpush.bf16.msra.mxu0 %v622
    %697 = vmatpush.bf16.msra.mxu0 %v621
    %698 = vmatpush.bf16.msra.mxu0 %v620
    %699 = vmatpush.bf16.msra.mxu0 %v619
    %700 = vmatmul.bf16.gmra.mxu0 %v496
    %v701 = vpop.f32.mrf.mxu0
    %v702 = vadd.f32 %v653, %v701
    %v703 = vpop.f32.mrf.mxu0
    %v704 = vadd.f32 %v655, %v703
    %705 = vmatmul.bf16.gmra.mxu0 %v498
    %v706 = vpop.f32.mrf.mxu0
    %v707 = vadd.f32 %v658, %v706
    %v708 = vpop.f32.mrf.mxu0
    %v709 = vadd.f32 %v660, %v708
    %710 = vmatmul.bf16.gmra.mxu0 %v500
    %v711 = vpop.f32.mrf.mxu0
    %v712 = vadd.f32 %v663, %v711
    %v713 = vpop.f32.mrf.mxu0
    %v714 = vadd.f32 %v665, %v713
    %715 = vmatmul.bf16.gmra.mxu0 %v502
    %v716 = vpop.f32.mrf.mxu0
    %v717 = vadd.f32 %v668, %v716
    %v718 = vpop.f32.mrf.mxu0
    %v719 = vadd.f32 %v670, %v718
    %720 = vmatmul.bf16.gmra.mxu0 %v504
    %v721 = vpop.f32.mrf.mxu0
    %v722 = vadd.f32 %v673, %v721
    %v723 = vpop.f32.mrf.mxu0
    %v724 = vadd.f32 %v675, %v723
    %725 = vmatmul.bf16.gmra.mxu0 %v506
    %v726 = vpop.f32.mrf.mxu0
    %v727 = vadd.f32 %v678, %v726
    %v728 = vpop.f32.mrf.mxu0
    %v729 = vadd.f32 %v680, %v728
    %730 = vmatmul.bf16.gmra.mxu0 %v508
    %v731 = vpop.f32.mrf.mxu0
    %v732 = vadd.f32 %v683, %v731
    %v733 = vpop.f32.mrf.mxu0
    %v734 = vadd.f32 %v685, %v733
    %735 = vmatmul.bf16.gmra.mxu0 %v510
    %v736 = vpop.f32.mrf.mxu0
    %v737 = vadd.f32 %v688, %v736
    %v738 = vpop.f32.mrf.mxu0
    %v739 = vadd.f32 %v690, %v738
    %740 = vdwg.mxu0
    %v741 = vpack.c.bf16 %v704, %v702
    %v742 = vpack.c.bf16 %v709, %v707
    %v743 = vpack.c.bf16 %v714, %v712
    %v744 = vpack.c.bf16 %v719, %v717
    %v745 = vpack.c.bf16 %v724, %v722
    %v746 = vpack.c.bf16 %v729, %v727
    %v747 = vpack.c.bf16 %v734, %v732
    %v748 = vpack.c.bf16 %v739, %v737
    %749 = vmatpush.bf16.msra.mxu0 %v748
    %750 = vmatpush.bf16.msra.mxu0 %v747
    %751 = vmatpush.bf16.msra.mxu0 %v746
    %752 = vmatpush.bf16.msra.mxu0 %v745
    %753 = vmatpush.bf16.msra.mxu0 %v744
    %754 = vmatpush.bf16.msra.mxu0 %v743
    %755 = vmatpush.bf16.msra.mxu0 %v742
    %756 = vmatpush.bf16.msra.mxu0 %v741
    %757 = vmatmul.bf16.gmra.mxu0 %v148
    %v758 = vpop.f32.mrf.mxu0
    %v759 = vadd.f32 0.0, %v758
    %v760 = vpop.f32.mrf.mxu0
    %v761 = vadd.f32 0.0, %v760
    %762 = vmatmul.bf16.gmra.mxu0 %v149
    %v763 = vpop.f32.mrf.mxu0
    %v764 = vadd.f32 0.0, %v763
    %v765 = vpop.f32.mrf.mxu0
    %v766 = vadd.f32 0.0, %v765
    %767 = vmatmul.bf16.gmra.mxu0 %v150
    %v768 = vpop.f32.mrf.mxu0
    %v769 = vadd.f32 0.0, %v768
    %v770 = vpop.f32.mrf.mxu0
    %v771 = vadd.f32 0.0, %v770
    %772 = vmatmul.bf16.gmra.mxu0 %v151
    %v773 = vpop.f32.mrf.mxu0
    %v774 = vadd.f32 0.0, %v773
    %v775 = vpop.f32.mrf.mxu0
    %v776 = vadd.f32 0.0, %v775
    %777 = vmatmul.bf16.gmra.mxu0 %v152
    %v778 = vpop.f32.mrf.mxu0
    %v779 = vadd.f32 0.0, %v778
    %v780 = vpop.f32.mrf.mxu0
    %v781 = vadd.f32 0.0, %v780
    %782 = vmatmul.bf16.gmra.mxu0 %v153
    %v783 = vpop.f32.mrf.mxu0
    %v784 = vadd.f32 0.0, %v783
    %v785 = vpop.f32.mrf.mxu0
    %v786 = vadd.f32 0.0, %v785
    %787 = vmatmul.bf16.gmra.mxu0 %v154
    %v788 = vpop.f32.mrf.mxu0
    %v789 = vadd.f32 0.0, %v788
    %v790 = vpop.f32.mrf.mxu0
    %v791 = vadd.f32 0.0, %v790
    %792 = vmatmul.bf16.gmra.mxu0 %v155
    %v793 = vpop.f32.mrf.mxu0
    %v794 = vadd.f32 0.0, %v793
    %v795 = vpop.f32.mrf.mxu0
    %v796 = vadd.f32 0.0, %v795
    %797 = vdwg.mxu0
    %798 = vst [vmem:[#allocation10] sm:$0xff] %v759
    %799 = vst [vmem:[#allocation10 + $0x8] sm:$0xff] %v761
    %800 = vst [vmem:[#allocation10 + $0x10] sm:$0xff] %v764
    %801 = vst [vmem:[#allocation10 + $0x18] sm:$0xff] %v766
    %802 = vst [vmem:[#allocation10 + $0x20] sm:$0xff] %v769
    %803 = vst [vmem:[#allocation10 + $0x28] sm:$0xff] %v771
    %804 = vst [vmem:[#allocation10 + $0x30] sm:$0xff] %v774
    %805 = vst [vmem:[#allocation10 + $0x38] sm:$0xff] %v776
    %806 = vst [vmem:[#allocation10 + $0x40] sm:$0xff] %v779
    %807 = vst [vmem:[#allocation10 + $0x48] sm:$0xff] %v781
    %808 = vst [vmem:[#allocation10 + $0x50] sm:$0xff] %v784
    %809 = vst [vmem:[#allocation10 + $0x58] sm:$0xff] %v786
    %810 = vst [vmem:[#allocation10 + $0x60] sm:$0xff] %v789
    %811 = vst [vmem:[#allocation10 + $0x68] sm:$0xff] %v791
    %812 = vst [vmem:[#allocation10 + $0x70] sm:$0xff] %v794
    %813 = vst [vmem:[#allocation10 + $0x78] sm:$0xff] %v796
    // Predicated region
    $region38: #{tpu_custom_call.1} parent=1 // pred_check
      _
    $region39: #{tpu_custom_call.1} parent=1 // pred_check_branch
      %815 = sbr.rel (0) target = $region41
    $region40: #{tpu_custom_call.1} parent=1 // pred_region
      %817 = vsyncadd [#allocation4], 0
      %s818 = sshll.u32 [#allocation10], 4
      %s819 = int_to_ptr.vmem [resolvable:$true] %s818
      %s820 = sshll.u32 %s5, 4
      %s821 = int_to_ptr.hbm [resolvable:$true] %s820
      %826 = dma.vmem_to_hbm [thread:$0]  %s819, 2048, %s821, [#allocation4], 128, 128, 8
    $region41: #{tpu_custom_call.1} parent=1 // pred_fallthru
      _
    // Predicated region
    $region42: #{tpu_custom_call.1} parent=1 // pred_check
      _
    $region43: #{tpu_custom_call.1} parent=1 // pred_check_branch
      %828 = sbr.rel (0) target = $region45
    $region44: #{tpu_custom_call.1} parent=1 // pred_region
      %830 = dma.done [#allocation4], 2048
    $region45: #{tpu_custom_call.1} parent=1 // pred_fallthru
      _
    %831 = vsyncpa [#allocation3], 1
    %832 = vsyncpa [#allocation6], 1
    %833 = vsyncpa [#allocation9], 1
    %834 = vsyncpa [#allocation4], 1

</llo_original>
